<compile_context>
chip_gen: v7x
topology: tpu7x:2x2x1
jax: 0.10.0
libtpu: 0.0.40
codegen_flags: <defaults>
</compile_context>

<pallas_src>
import functools

import jax
import jax.numpy as jnp
from jax.experimental import pallas as pl
from jax.experimental.pallas import tpu as pltpu

LN_EPS = 1e-5
LANE = 128      # vreg lane width
SUBLANE = 8     # f32 sublane height


def _round_up(x, m):
    return (x + m - 1) // m * m


def _layernorm(x, gamma, beta, d_true):
    """Row-wise LayerNorm over the last (lane) axis.

    Statistics use only the first `d_true` lanes; lanes >= d_true hold zeros
    (wrapper zero-pads) and produce zero output (gamma/beta padded with zeros),
    so they can be sliced away outside the kernel.
    """
    d_pad = x.shape[-1]
    if d_pad == d_true:
        mean = jnp.mean(x, axis=-1, keepdims=True)
        centered = x - mean
        var = jnp.mean(centered * centered, axis=-1, keepdims=True)
    else:
        inv_d = jnp.float32(1.0 / d_true)
        lane = jax.lax.broadcasted_iota(jnp.int32, (1, d_pad), 1)
        mask = lane < d_true
        mean = jnp.sum(x, axis=-1, keepdims=True) * inv_d      # pad lanes are 0
        centered = jnp.where(mask, x - mean, 0.0)
        var = jnp.sum(centered * centered, axis=-1, keepdims=True) * inv_d
    return centered * jax.lax.rsqrt(var + LN_EPS) * gamma + beta


def _grn_kernel(gt_ref, gh_ref, q_ref, w_ref, gamma_ref, beta_ref, out_ref,
                *, nh, tr, d_true, mm_dtype, n_prefix_tiles):
    """One row tile of G_t: gated path for prefix tiles, plain LN for the tail."""
    i = pl.program_id(0)
    gt = gt_ref[...].astype(jnp.float32)
    gamma = gamma_ref[...]
    beta = beta_ref[...]

    @pl.when(i < n_prefix_tiles)
    def _():
        gh = gh_ref[...].astype(jnp.float32)
        qv = q_ref[...].astype(jnp.float32)
        # Fused gate matmul: lane-aligned concat (each chunk is a multiple of
        # 128 lanes -> no cross-lane shuffles), single MXU dot, f32 accumulate.
        lhs = jnp.concatenate([gt.astype(mm_dtype),
                               gh.astype(mm_dtype),
                               qv.astype(mm_dtype)], axis=-1)
        z = jnp.dot(lhs, w_ref[...], preferred_element_type=jnp.float32)
        g = jax.nn.sigmoid(z)
        x = gt * g + gh                      # gated residual update (f32)
        if nh % tr != 0:
            # Boundary tile: rows >= nh keep the ungated G_t value.
            row = i * tr + jax.lax.broadcasted_iota(jnp.int32, x.shape, 0)
            x = jnp.where(row < nh, x, gt)
        out_ref[...] = _layernorm(x, gamma, beta, d_true).astype(out_ref.dtype)

    @pl.when(i >= n_prefix_tiles)
    def _():
        # Pure streaming LayerNorm on the tail (no gate compute).
        out_ref[...] = _layernorm(gt, gamma, beta, d_true).astype(out_ref.dtype)


def _ln_kernel(gt_ref, gamma_ref, beta_ref, out_ref, *, d_true):
    out_ref[...] = _layernorm(gt_ref[...].astype(jnp.float32),
                              gamma_ref[...], beta_ref[...],
                              d_true).astype(out_ref.dtype)


def gated_residue_norm(G_h, G_t, q, h_map_t, W, gamma, beta, *,
                       tile_rows=256, matmul_dtype=jnp.bfloat16,
                       out_dtype=jnp.float32):
    """G_h:[Nh,d]  G_t:[Nt,d]  q:[Nh,d]  h_map_t:int(==Nh)  W:[d,3d]  gamma,beta:[d]."""
    nt, d = G_t.shape
    nh = G_h.shape[0]
    assert isinstance(h_map_t, int) and h_map_t == nh

    f32 = jnp.float32
    d_pad = _round_up(d, LANE)

    # Cap the row tile for large d so resident weight + 2-deep pipeline fits
    # the smallest scoped-VMEM default (v5e 16 MiB).
    if d_pad >= 1024:
        tile_rows = min(tile_rows, 128)

    rows8 = _round_up(max(nt, 1), SUBLANE)
    tr = min(_round_up(tile_rows, SUBLANE), rows8)
    # Megacore: prefer >= 2 row tiles so the "parallel" axis can feed both
    # v7x TensorCores instead of collapsing to a 1-tile grid.
    if _round_up(nt, tr) // tr < 2 and rows8 >= 2 * SUBLANE:
        tr = max(SUBLANE, _round_up(rows8 // 2, SUBLANE))
    nt_pad = _round_up(nt, tr)
    grid = (nt_pad // tr,)

    gamma_p = jnp.pad(gamma.astype(f32), (0, d_pad - d)).reshape(1, d_pad)
    beta_p = jnp.pad(beta.astype(f32), (0, d_pad - d)).reshape(1, d_pad)

    def maybe_pad(x, rows_to):
        r, c = x.shape
        if r == rows_to and c == d_pad:
            return x                                   # no padding copy
        return jnp.pad(x, ((0, rows_to - r), (0, d_pad - c)))

    gt_p = maybe_pad(G_t, nt_pad)

    row_spec = pl.BlockSpec((tr, d_pad), lambda i: (i, 0))
    const_vec = pl.BlockSpec((1, d_pad), lambda i: (0, 0))

    if nh == 0:
        # Degenerate integer branch: output is just LayerNorm(G_t).
        out = pl.pallas_call(
            functools.partial(_ln_kernel, d_true=d),
            out_shape=jax.ShapeDtypeStruct((nt_pad, d_pad), out_dtype),
            grid=grid,
            in_specs=[row_spec, const_vec, const_vec],
            out_specs=row_spec,
            compiler_params=pltpu.CompilerParams(
                dimension_semantics=("parallel",)),
        )(gt_p, gamma_p, beta_p)
        return out if (nt_pad == nt and d_pad == d) else out[:nt, :d]

    n_prefix_tiles = -(-nh // tr)
    nh_pad = n_prefix_tiles * tr
    gh_p = maybe_pad(G_h, nh_pad)
    q_p = maybe_pad(q, nh_pad)

    # Fused gate weight.  Linear(3d, d).weight is [d, 3d]; the right-multiply
    # form is W.T = [3d, d].  Pad each d x d chunk to d_pad x d_pad so the
    # kernel's lane-axis concat of [gt | gh | q] lines up with the K axis.
    wt = W.T

    def pad_chunk(w):
        return w if d == d_pad else jnp.pad(w, ((0, d_pad - d), (0, d_pad - d)))

    w_full = jnp.concatenate([pad_chunk(wt[:d]),
                              pad_chunk(wt[d:2 * d]),
                              pad_chunk(wt[2 * d:])], axis=0).astype(matmul_dtype)

    # G_h / q block index is clamped to the last prefix tile: on tail tiles the
    # index does not change between grid steps, so the pipeline skips the
    # (unused) re-fetch and the tail stays a pure streaming LayerNorm.
    clamp_spec = pl.BlockSpec(
        (tr, d_pad), lambda i: (jnp.minimum(i, n_prefix_tiles - 1), 0))
    w_spec = pl.BlockSpec((3 * d_pad, d_pad), lambda i: (0, 0))

    mm_item = jnp.dtype(matmul_dtype).itemsize
    in_item = jnp.dtype(gt_p.dtype).itemsize
    out_item = jnp.dtype(out_dtype).itemsize
    vmem_needed = (3 * d_pad * d_pad * mm_item            # resident fused weight
                   + 4 * d_pad * 4                        # gamma / beta
                   + 2 * 3 * tr * d_pad * in_item         # 2-deep gt/gh/q tiles
                   + 2 * tr * d_pad * out_item            # 2-deep output tiles
                   + tr * 3 * d_pad * mm_item             # lhs concat temp
                   + 3 * tr * d_pad * 4)                  # z / x / f32 temps
    vmem_limit = int(min(64 * 1024 * 1024, max(2 * vmem_needed, 8 * 1024 * 1024)))

    out = pl.pallas_call(
        functools.partial(_grn_kernel, nh=nh, tr=tr, d_true=d,
                          mm_dtype=matmul_dtype, n_prefix_tiles=n_prefix_tiles),
        out_shape=jax.ShapeDtypeStruct((nt_pad, d_pad), out_dtype),
        grid=grid,
        in_specs=[row_spec, clamp_spec, clamp_spec, w_spec, const_vec, const_vec],
        out_specs=row_spec,
        compiler_params=pltpu.CompilerParams(
            dimension_semantics=("parallel",),
            vmem_limit_bytes=vmem_limit),
    )(gt_p, gh_p, q_p, w_full, gamma_p, beta_p)

    return out if (nt_pad == nt and d_pad == d) else out[:nt, :d]


def _reference(G_h, G_t, q, h_map_t, W, gamma, beta):
    if h_map_t > 0:
        gt_has_h = G_t[:h_map_t]
        x_cat = jnp.concatenate([gt_has_h, G_h, q], axis=-1)
        g = jax.nn.sigmoid(x_cat @ W.T)
        gh_updated = gt_has_h * g + G_h
        gt_new = jnp.concatenate([gh_updated, G_t[h_map_t:]], axis=0)
    else:
        gt_new = G_t
    mean = jnp.mean(gt_new, axis=-1, keepdims=True)
    var = jnp.mean((gt_new - mean) ** 2, axis=-1, keepdims=True)
    return (gt_new - mean) / jnp.sqrt(var + LN_EPS) * gamma + beta


if __name__ == "__main__":
    def make_inputs(key, d, n_t, n_h):
        k_gh, k_gt, k_q, k_w, k_g, k_b = jax.random.split(key, 6)
        G_h = jax.random.normal(k_gh, (n_h, d), dtype=jnp.float32)
        G_t = jax.random.normal(k_gt, (n_t, d), dtype=jnp.float32)
        q = jax.random.normal(k_q, (n_h, d), dtype=jnp.float32)
        bound = 1.0 / (3 * d) ** 0.5
        W = jax.random.uniform(k_w, (d, 3 * d), dtype=jnp.float32,
                               minval=-bound, maxval=bound)
        gamma = 1.0 + 0.1 * jax.random.normal(k_g, (d,), dtype=jnp.float32)
        beta = 0.05 * jax.random.normal(k_b, (d,), dtype=jnp.float32)
        return G_h, G_t, q, W, gamma, beta

    key = jax.random.PRNGKey(0)
    k1, k2, k3 = jax.random.split(key, 3)

    # Config A: small d (lane padding), prefix NOT tile-aligned (boundary mask
    # path), f32 matmul -> tight tolerance.
    d, n_t, n_h = 32, 16, 5
    G_h, G_t, q, W, gamma, beta = make_inputs(k1, d, n_t, n_h)
    out = jax.block_until_ready(
        gated_residue_norm(G_h, G_t, q, n_h, W, gamma, beta,
                           matmul_dtype=jnp.float32))
    ref = _reference(G_h, G_t, q, n_h, W, gamma, beta)
    assert out.shape == (n_t, d)
    assert jnp.allclose(out, ref, atol=1e-4, rtol=1e-4), \
        float(jnp.max(jnp.abs(out - ref)))

    # Config B: default bf16 matmul inputs (f32 accumulation) -> looser tol.
    d, n_t, n_h = 32, 16, 8
    G_h, G_t, q, W, gamma, beta = make_inputs(k2, d, n_t, n_h)
    out = jax.block_until_ready(
        gated_residue_norm(G_h, G_t, q, n_h, W, gamma, beta))
    ref = _reference(G_h, G_t, q, n_h, W, gamma, beta)
    assert out.shape == (n_t, d)
    assert jnp.allclose(out, ref, atol=5e-2, rtol=5e-2), \
        float(jnp.max(jnp.abs(out - ref)))

    # Config C: lane-aligned d=128 (no padding copies), ragged row count,
    # f32 matmul -> tight tolerance.
    d, n_t, n_h = 128, 24, 16
    G_h, G_t, q, W, gamma, beta = make_inputs(k3, d, n_t, n_h)
    out = jax.block_until_ready(
        gated_residue_norm(G_h, G_t, q, n_h, W, gamma, beta,
                           matmul_dtype=jnp.float32))
    ref = _reference(G_h, G_t, q, n_h, W, gamma, beta)
    assert out.shape == (n_t, d)
    assert jnp.allclose(out, ref, atol=1e-4, rtol=1e-4), \
        float(jnp.max(jnp.abs(out - ref)))

    print("KERNEL_OK")
</pallas_src>

<mosaic_0001>
module attributes {stable_mosaic.version = 11 : i64} {
  func.func @_grn_kernel(%arg0: i32, %arg1: memref<8x128xf32, #tpu.memory_space<vmem>>, %arg2: memref<8x128xf32, #tpu.memory_space<vmem>>, %arg3: memref<8x128xf32, #tpu.memory_space<vmem>>, %arg4: memref<384x128xf32, #tpu.memory_space<vmem>>, %arg5: memref<1x128xf32, #tpu.memory_space<vmem>>, %arg6: memref<1x128xf32, #tpu.memory_space<vmem>>, %arg7: memref<8x128xf32, #tpu.memory_space<vmem>>) attributes {dimension_semantics = [#tpu.dimension_semantics<parallel>], iteration_bounds = array<i64: 2>, scalar_prefetch = 0 : i64, scratch_operands = 0 : i64, tpu.core_type = #tpu.core_type<tc>, window_params = [{transform_indices = @transform_0, window_bounds = array<i64: 8, 128>}, {transform_indices = @transform_1, window_bounds = array<i64: 8, 128>}, {transform_indices = @transform_2, window_bounds = array<i64: 8, 128>}, {pipeline_mode = #tpu.pipeline_mode<synchronous>, transform_indices = @transform_3, window_bounds = array<i64: 384, 128>}, {pipeline_mode = #tpu.pipeline_mode<synchronous>, transform_indices = @transform_4, window_bounds = array<i64: 1, 128>}, {pipeline_mode = #tpu.pipeline_mode<synchronous>, transform_indices = @transform_5, window_bounds = array<i64: 1, 128>}, {transform_indices = @transform_6, window_bounds = array<i64: 8, 128>}]} {
    %c0 = arith.constant 0 : index
    %c0_0 = arith.constant 0 : index
    %0 = vector.load %arg1[%c0, %c0_0] : memref<8x128xf32, #tpu.memory_space<vmem>>, vector<8x128xf32>
    %c0_1 = arith.constant 0 : index
    %c0_2 = arith.constant 0 : index
    %1 = vector.load %arg5[%c0_1, %c0_2] : memref<1x128xf32, #tpu.memory_space<vmem>>, vector<1x128xf32>
    %c0_3 = arith.constant 0 : index
    %c0_4 = arith.constant 0 : index
    %2 = vector.load %arg6[%c0_3, %c0_4] : memref<1x128xf32, #tpu.memory_space<vmem>>, vector<1x128xf32>
    %c1_i32 = arith.constant 1 : i32
    %3 = arith.cmpi slt, %arg0, %c1_i32 : i32
    %4 = arith.extui %3 : i1 to i32
    %c0_i32 = arith.constant 0 : i32
    %5 = arith.cmpi ne, %4, %c0_i32 : i32
    scf.if %5 {
      %c0_7 = arith.constant 0 : index
      %c0_8 = arith.constant 0 : index
      %9 = vector.load %arg2[%c0_7, %c0_8] : memref<8x128xf32, #tpu.memory_space<vmem>>, vector<8x128xf32>
      %c0_9 = arith.constant 0 : index
      %c0_10 = arith.constant 0 : index
      %10 = vector.load %arg3[%c0_9, %c0_10] : memref<8x128xf32, #tpu.memory_space<vmem>>, vector<8x128xf32>
      %11 = tpu.concatenate %0, %9, %10 in 1 : vector<8x128xf32>, vector<8x128xf32>, vector<8x128xf32> -> vector<8x384xf32>
      %c0_11 = arith.constant 0 : index
      %c0_12 = arith.constant 0 : index
      %12 = vector.load %arg4[%c0_11, %c0_12] : memref<384x128xf32, #tpu.memory_space<vmem>>, vector<384x128xf32>
      %cst = arith.constant dense<0.000000e+00> : vector<8x128xf32>
      %13 = tpu.matmul %11, %12, %cst {dimension_numbers = #tpu.dot_dimension_numbers<[1], [0], [0], [1], [0, 0, 1, 1], [], []>} : vector<8x384xf32>, vector<384x128xf32>, vector<8x128xf32> -> vector<8x128xf32>
      %14 = arith.negf %13 : vector<8x128xf32>
      %15 = math.exp %14 : vector<8x128xf32>
      %cst_13 = arith.constant 1.000000e+00 : f32
      %16 = vector.broadcast %cst_13 : f32 to vector<8x128xf32>
      %17 = arith.addf %16, %15 : vector<8x128xf32>
      %18 = arith.divf %16, %17 : vector<8x128xf32>
      %19 = arith.mulf %0, %18 : vector<8x128xf32>
      %20 = arith.addf %19, %9 : vector<8x128xf32>
      %c8_i32 = arith.constant 8 : i32
      %21 = arith.muli %arg0, %c8_i32 : i32
      %22 = tpu.iota {dimensions = array<i32: 0>} : vector<8x128xi32>
      %23 = vector.broadcast %21 : i32 to vector<8x128xi32>
      %24 = arith.addi %23, %22 : vector<8x128xi32>
      %c5_i32 = arith.constant 5 : i32
      %25 = vector.broadcast %c5_i32 : i32 to vector<8x128xi32>
      %26 = arith.cmpi slt, %24, %25 : vector<8x128xi32>
      %27 = arith.select %26, %20, %0 : vector<8x128xi1>, vector<8x128xf32>
      %28 = tpu.iota {dimensions = array<i32: 1>} : vector<1x128xi32>
      %c32_i32 = arith.constant 32 : i32
      %29 = vector.broadcast %c32_i32 : i32 to vector<1x128xi32>
      %30 = arith.cmpi slt, %28, %29 : vector<1x128xi32>
      %cst_14 = arith.constant dense<0.000000e+00> : vector<8xf32>
      %31 = vector.multi_reduction <add>, %27, %cst_14 [1] : vector<8x128xf32> to vector<8xf32>
      %32 = vector.shape_cast %31 : vector<8xf32> to vector<8x1xf32>
      %cst_15 = arith.constant 3.125000e-02 : f32
      %33 = vector.broadcast %cst_15 : f32 to vector<8x1xf32>
      %34 = arith.mulf %32, %33 : vector<8x1xf32>
      %35 = vector.broadcast %34 : vector<8x1xf32> to vector<8x128xf32>
      %36 = arith.subf %27, %35 : vector<8x128xf32>
      %cst_16 = arith.constant 0.000000e+00 : f32
      %37 = vector.shape_cast %30 : vector<1x128xi1> to vector<1x128xi1>
      %38 = vector.broadcast %37 : vector<1x128xi1> to vector<8x128xi1>
      %39 = vector.broadcast %cst_16 : f32 to vector<8x128xf32>
      %40 = arith.select %38, %36, %39 : vector<8x128xi1>, vector<8x128xf32>
      %41 = arith.mulf %40, %40 : vector<8x128xf32>
      %cst_17 = arith.constant dense<0.000000e+00> : vector<8xf32>
      %42 = vector.multi_reduction <add>, %41, %cst_17 [1] : vector<8x128xf32> to vector<8xf32>
      %43 = vector.shape_cast %42 : vector<8xf32> to vector<8x1xf32>
      %cst_18 = arith.constant 3.125000e-02 : f32
      %44 = vector.broadcast %cst_18 : f32 to vector<8x1xf32>
      %45 = arith.mulf %43, %44 : vector<8x1xf32>
      %cst_19 = arith.constant 9.99999974E-6 : f32
      %46 = vector.broadcast %cst_19 : f32 to vector<8x1xf32>
      %47 = arith.addf %45, %46 : vector<8x1xf32>
      %48 = math.rsqrt %47 : vector<8x1xf32>
      %49 = vector.broadcast %48 : vector<8x1xf32> to vector<8x128xf32>
      %50 = arith.mulf %40, %49 : vector<8x128xf32>
      %51 = vector.broadcast %1 : vector<1x128xf32> to vector<8x128xf32>
      %52 = arith.mulf %50, %51 : vector<8x128xf32>
      %53 = vector.broadcast %2 : vector<1x128xf32> to vector<8x128xf32>
      %54 = arith.addf %52, %53 : vector<8x128xf32>
      %c0_20 = arith.constant 0 : index
      %c0_21 = arith.constant 0 : index
      %55 = vector.load %arg7[%c0_20, %c0_21] : memref<8x128xf32, #tpu.memory_space<vmem>>, vector<8x128xf32>
      tpu.vector_store %arg7[%c0_20, %c0_21], %54 {strides = array<i32>} : memref<8x128xf32, #tpu.memory_space<vmem>>, vector<8x128xf32>,
    } else {
    }
    %c1_i32_5 = arith.constant 1 : i32
    %6 = arith.cmpi sge, %arg0, %c1_i32_5 : i32
    %7 = arith.extui %6 : i1 to i32
    %c0_i32_6 = arith.constant 0 : i32
    %8 = arith.cmpi ne, %7, %c0_i32_6 : i32
    scf.if %8 {
      %9 = tpu.iota {dimensions = array<i32: 1>} : vector<1x128xi32>
      %c32_i32 = arith.constant 32 : i32
      %10 = vector.broadcast %c32_i32 : i32 to vector<1x128xi32>
      %11 = arith.cmpi slt, %9, %10 : vector<1x128xi32>
      %cst = arith.constant dense<0.000000e+00> : vector<8xf32>
      %12 = vector.multi_reduction <add>, %0, %cst [1] : vector<8x128xf32> to vector<8xf32>
      %13 = vector.shape_cast %12 : vector<8xf32> to vector<8x1xf32>
      %cst_7 = arith.constant 3.125000e-02 : f32
      %14 = vector.broadcast %cst_7 : f32 to vector<8x1xf32>
      %15 = arith.mulf %13, %14 : vector<8x1xf32>
      %16 = vector.broadcast %15 : vector<8x1xf32> to vector<8x128xf32>
      %17 = arith.subf %0, %16 : vector<8x128xf32>
      %cst_8 = arith.constant 0.000000e+00 : f32
      %18 = vector.shape_cast %11 : vector<1x128xi1> to vector<1x128xi1>
      %19 = vector.broadcast %18 : vector<1x128xi1> to vector<8x128xi1>
      %20 = vector.broadcast %cst_8 : f32 to vector<8x128xf32>
      %21 = arith.select %19, %17, %20 : vector<8x128xi1>, vector<8x128xf32>
      %22 = arith.mulf %21, %21 : vector<8x128xf32>
      %cst_9 = arith.constant dense<0.000000e+00> : vector<8xf32>
      %23 = vector.multi_reduction <add>, %22, %cst_9 [1] : vector<8x128xf32> to vector<8xf32>
      %24 = vector.shape_cast %23 : vector<8xf32> to vector<8x1xf32>
      %cst_10 = arith.constant 3.125000e-02 : f32
      %25 = vector.broadcast %cst_10 : f32 to vector<8x1xf32>
      %26 = arith.mulf %24, %25 : vector<8x1xf32>
      %cst_11 = arith.constant 9.99999974E-6 : f32
      %27 = vector.broadcast %cst_11 : f32 to vector<8x1xf32>
      %28 = arith.addf %26, %27 : vector<8x1xf32>
      %29 = math.rsqrt %28 : vector<8x1xf32>
      %30 = vector.broadcast %29 : vector<8x1xf32> to vector<8x128xf32>
      %31 = arith.mulf %21, %30 : vector<8x128xf32>
      %32 = vector.broadcast %1 : vector<1x128xf32> to vector<8x128xf32>
      %33 = arith.mulf %31, %32 : vector<8x128xf32>
      %34 = vector.broadcast %2 : vector<1x128xf32> to vector<8x128xf32>
      %35 = arith.addf %33, %34 : vector<8x128xf32>
      %c0_12 = arith.constant 0 : index
      %c0_13 = arith.constant 0 : index
      %36 = vector.load %arg7[%c0_12, %c0_13] : memref<8x128xf32, #tpu.memory_space<vmem>>, vector<8x128xf32>
      tpu.vector_store %arg7[%c0_12, %c0_13], %35 {strides = array<i32>} : memref<8x128xf32, #tpu.memory_space<vmem>>, vector<8x128xf32>,
    } else {
    }
    return
  }
  func.func @transform_0(%arg0: i32) -> (i32, i32) {
    %c0_i32 = arith.constant 0 : i32
    %c0_i32_0 = arith.constant 0 : i32
    return %arg0, %c0_i32 : i32, i32
  }
  func.func @transform_1(%arg0: i32) -> (i32, i32) {
    %c0_i32 = arith.constant 0 : i32
    %0 = arith.minsi %arg0, %c0_i32 : i32
    %c0_i32_0 = arith.constant 0 : i32
    %c0_i32_1 = arith.constant 0 : i32
    return %0, %c0_i32_0 : i32, i32
  }
  func.func @transform_2(%arg0: i32) -> (i32, i32) {
    %c0_i32 = arith.constant 0 : i32
    %0 = arith.minsi %arg0, %c0_i32 : i32
    %c0_i32_0 = arith.constant 0 : i32
    %c0_i32_1 = arith.constant 0 : i32
    return %0, %c0_i32_0 : i32, i32
  }
  func.func @transform_3(%arg0: i32) -> (i32, i32) {
    %c0_i32 = arith.constant 0 : i32
    %c0_i32_0 = arith.constant 0 : i32
    %c0_i32_1 = arith.constant 0 : i32
    return %c0_i32, %c0_i32_0 : i32, i32
  }
  func.func @transform_4(%arg0: i32) -> (i32, i32) {
    %c0_i32 = arith.constant 0 : i32
    %c0_i32_0 = arith.constant 0 : i32
    %c0_i32_1 = arith.constant 0 : i32
    return %c0_i32, %c0_i32_0 : i32, i32
  }
  func.func @transform_5(%arg0: i32) -> (i32, i32) {
    %c0_i32 = arith.constant 0 : i32
    %c0_i32_0 = arith.constant 0 : i32
    %c0_i32_1 = arith.constant 0 : i32
    return %c0_i32, %c0_i32_0 : i32, i32
  }
  func.func @transform_6(%arg0: i32) -> (i32, i32) {
    %c0_i32 = arith.constant 0 : i32
    %c0_i32_0 = arith.constant 0 : i32
    return %arg0, %c0_i32 : i32, i32
  }
}

</mosaic_0001>

<llo_original>
// kernel: tpu_custom_call.1
$region0: #{tpu_custom_call.1}
  #allocation0 [shape = 'u32[]', space=smem, size = 0x4, offset = 0x4, fixed_abs, tag = 'smem constant byte address 0x4 - core index']
  #allocation1 [shape = 'u32[144,128]{1,0:T(1,128)}', space=vmem, size = 0x12000, scoped, tag = 'internal scratch']
  %s0 = inlined_call_operand.hbm [shape: f32[16,128], index: 0, kind: input, shape index: {}]
  %s1 = inlined_call_operand.hbm [shape: f32[8,128], index: 1, kind: input, shape index: {}]
  %s2 = inlined_call_operand.hbm [shape: f32[8,128], index: 2, kind: input, shape index: {}]
  %s3 = inlined_call_operand.hbm [shape: f32[384,128], index: 3, kind: input, shape index: {}]
  %s4 = inlined_call_operand.vmem [shape: f32[1,128], index: 4, kind: input, shape index: {}]
  %s5 = inlined_call_operand.vmem [shape: f32[1,128], index: 5, kind: input, shape index: {}]
  %s6 = inlined_call_operand.hbm [shape: f32[16,128], index: 6, kind: output, shape index: {}]
  %s7 = sld [smem:[#allocation0]]
  $region81: #{tpu_custom_call.1} parent=0
    _
  %s9 = ssub.s32 1, %s7
  %s10 = scalar_select 0, %s9, %s7
  $region1: #{tpu_custom_call.1} parent=0
    #allocation2 [shape = 'u8[8192]{0}', space=vmem, size = 0x2000, scoped, tag = 'input window, operand 0']
    #allocation3 [shape = 's32[2]{0}', space=sflag, size = 0x8, scoped, tag = 'scoped memory for tpu_custom_call.1']
    #allocation4 [shape = 's32[2]{0}', space=sflag, size = 0x8, scoped, tag = 'scoped memory for tpu_custom_call.1']
    #allocation5 [shape = 'u8[8192]{0}', space=vmem, size = 0x2000, scoped, tag = 'input window, operand 1']
    #allocation6 [shape = 's32[2]{0}', space=sflag, size = 0x8, scoped, tag = 'scoped memory for tpu_custom_call.1']
    #allocation7 [shape = 'u8[8192]{0}', space=vmem, size = 0x2000, scoped, tag = 'input window, operand 2']
    #allocation8 [shape = 'u8[196608]{0}', space=vmem, size = 0x30000, scoped, tag = 'input window, operand 3, single buffered']
    #allocation9 [shape = 's32[1]{0}', space=sflag, size = 0x4, scoped, tag = 'scoped memory for tpu_custom_call.1']
    #allocation10 [shape = 'u8[8192]{0}', space=vmem, size = 0x2000, scoped, tag = 'output window, operand 0']
    %11 = vsyncpa [#allocation3], 0
    %s12 = scalar_lea.sflag [#allocation3], 1
    %13 = vsyncpa %s12, 0
    %14 = vsyncpa [#allocation6], 0
    %s15 = scalar_lea.sflag [#allocation6], 1
    %16 = vsyncpa %s15, 0
    %17 = vsyncpa [#allocation9], 0
    %18 = vsyncpa [#allocation4], 0
    %s19 = scalar_lea.sflag [#allocation4], 1
    %20 = vsyncpa %s19, 0
    loop: start=0, step=1, limit=4
    $region2: #{tpu_custom_call.1} parent=1 // loop_pre_header
      _
    $region3: #{tpu_custom_call.1} parent=1 // loop_header
      %s22 = sphi 0, %s26
      %p23 = scmp.ge.s32.totalorder %s22, 4
      %s32 = sphi 0, %s34
      %s35 = sphi 0, %s32
      %s36 = sphi 0, %s35
      %s52 = sphi 0, %s36
      %s62 = sphi 0, %s64
      %s65 = sphi 0, %s62
      %s66 = sphi 0, %s65
      %s82 = sphi 0, %s66
      %s92 = sphi 0, %s94
      %s95 = sphi 0, %s92
      %s96 = sphi 0, %s95
      %s112 = sphi 0, %s96
      %s116 = sphi 0, %s116
      %s118 = sphi 0, %s116
      %s119 = sphi 0, %s118
      %s133 = sphi 0, %s119
      %s137 = sphi 0, %s137
      %s139 = sphi 0, %s137
      %s140 = sphi 0, %s139
      %s154 = sphi 0, %s140
      %s158 = sphi 0, %s158
      %s160 = sphi 0, %s158
      %s161 = sphi 0, %s160
      %s175 = sphi 0, %s161
      %s181 = sphi 0, %s183
      %s184 = sphi 0, %s181
      %s185 = sphi 0, %s184
      %s201 = sphi 0, %s185
    $region4: #{tpu_custom_call.1} parent=1 // loop_header_branch
      %25 = sbr.rel (%p23) target = $region8
    $region5: #{tpu_custom_call.1} parent=1 // loop_body
      %s27 = ssub.s32 %s22, 1
      %s28 = ssub.s32 %s22, 2
      %s29 = sadd.s32 %s22, 1
      %s30 = ssub.s32 %s22, %s29
      %p31 = scmp.eq.s32.totalorder %s30, 0
      %s33 = sadd.s32 %s32, 1
      %s34 = scalar_select %p31, %s32, %s33
      %p37 = pneg %p31
      %p38 = scmp.eq.s32.totalorder %s22, 1
      %p39 = por %p37, %p38
      %p40 = scmp.ne.s32.totalorder %s32, %s35
      %p41 = scmp.eq.s32.totalorder %s22, 0
      %p42 = por %p40, %p41
      %p43 = scmp.ne.s32.totalorder %s32, %s35
      %p44 = scmp.eq.s32.totalorder %s27, 1
      %p45 = por %p43, %p44
      %p46 = scmp.ne.s32.totalorder %s35, %s36
      %p47 = scmp.eq.s32.totalorder %s27, 0
      %p48 = por %p46, %p47
      %p49 = scmp.ne.s32.totalorder %s35, %s36
      %p50 = scmp.eq.s32.totalorder %s28, 1
      %p51 = por %p49, %p50
      %p53 = scmp.ne.s32.totalorder %s36, %s52
      %p54 = scmp.eq.s32.totalorder %s28, 0
      %p55 = por %p53, %p54
      %p56 = scmp.lt.s32.totalorder %s22, 0
      %s57 = scalar_select %p56, %s22, 0
      %p58 = scmp.lt.s32.totalorder %s29, 0
      %s59 = scalar_select %p58, %s29, 0
      %s60 = ssub.s32 %s57, %s59
      %p61 = scmp.eq.s32.totalorder %s60, 0
      %s63 = sadd.s32 %s62, 1
      %s64 = scalar_select %p61, %s62, %s63
      %p67 = pneg %p61
      %p68 = scmp.eq.s32.totalorder %s22, 1
      %p69 = por %p67, %p68
      %p70 = scmp.ne.s32.totalorder %s62, %s65
      %p71 = scmp.eq.s32.totalorder %s22, 0
      %p72 = por %p70, %p71
      %p73 = scmp.ne.s32.totalorder %s62, %s65
      %p74 = scmp.eq.s32.totalorder %s27, 1
      %p75 = por %p73, %p74
      %p76 = scmp.ne.s32.totalorder %s65, %s66
      %p77 = scmp.eq.s32.totalorder %s27, 0
      %p78 = por %p76, %p77
      %p79 = scmp.ne.s32.totalorder %s65, %s66
      %p80 = scmp.eq.s32.totalorder %s28, 1
      %p81 = por %p79, %p80
      %p83 = scmp.ne.s32.totalorder %s66, %s82
      %p84 = scmp.eq.s32.totalorder %s28, 0
      %p85 = por %p83, %p84
      %p86 = scmp.lt.s32.totalorder %s22, 0
      %s87 = scalar_select %p86, %s22, 0
      %p88 = scmp.lt.s32.totalorder %s29, 0
      %s89 = scalar_select %p88, %s29, 0
      %s90 = ssub.s32 %s87, %s89
      %p91 = scmp.eq.s32.totalorder %s90, 0
      %s93 = sadd.s32 %s92, 1
      %s94 = scalar_select %p91, %s92, %s93
      %p97 = pneg %p91
      %p98 = scmp.eq.s32.totalorder %s22, 1
      %p99 = por %p97, %p98
      %p100 = scmp.ne.s32.totalorder %s92, %s95
      %p101 = scmp.eq.s32.totalorder %s22, 0
      %p102 = por %p100, %p101
      %p103 = scmp.ne.s32.totalorder %s92, %s95
      %p104 = scmp.eq.s32.totalorder %s27, 1
      %p105 = por %p103, %p104
      %p106 = scmp.ne.s32.totalorder %s95, %s96
      %p107 = scmp.eq.s32.totalorder %s27, 0
      %p108 = por %p106, %p107
      %p109 = scmp.ne.s32.totalorder %s95, %s96
      %p110 = scmp.eq.s32.totalorder %s28, 1
      %p111 = por %p109, %p110
      %p113 = scmp.ne.s32.totalorder %s96, %s112
      %p114 = scmp.eq.s32.totalorder %s28, 0
      %p115 = por %p113, %p114
      %s117 = sadd.s32 %s116, 1
      %p120 = scmp.eq.s32.totalorder %s22, 1
      %p121 = scmp.ne.s32.totalorder %s116, %s118
      %p122 = scmp.eq.s32.totalorder %s22, 0
      %p123 = por %p121, %p122
      %p124 = scmp.ne.s32.totalorder %s116, %s118
      %p125 = scmp.eq.s32.totalorder %s27, 1
      %p126 = por %p124, %p125
      %p127 = scmp.ne.s32.totalorder %s118, %s119
      %p128 = scmp.eq.s32.totalorder %s27, 0
      %p129 = por %p127, %p128
      %p130 = scmp.ne.s32.totalorder %s118, %s119
      %p131 = scmp.eq.s32.totalorder %s28, 1
      %p132 = por %p130, %p131
      %p134 = scmp.ne.s32.totalorder %s119, %s133
      %p135 = scmp.eq.s32.totalorder %s28, 0
      %p136 = por %p134, %p135
      %s138 = sadd.s32 %s137, 1
      %p141 = scmp.eq.s32.totalorder %s22, 1
      %p142 = scmp.ne.s32.totalorder %s137, %s139
      %p143 = scmp.eq.s32.totalorder %s22, 0
      %p144 = por %p142, %p143
      %p145 = scmp.ne.s32.totalorder %s137, %s139
      %p146 = scmp.eq.s32.totalorder %s27, 1
      %p147 = por %p145, %p146
      %p148 = scmp.ne.s32.totalorder %s139, %s140
      %p149 = scmp.eq.s32.totalorder %s27, 0
      %p150 = por %p148, %p149
      %p151 = scmp.ne.s32.totalorder %s139, %s140
      %p152 = scmp.eq.s32.totalorder %s28, 1
      %p153 = por %p151, %p152
      %p155 = scmp.ne.s32.totalorder %s140, %s154
      %p156 = scmp.eq.s32.totalorder %s28, 0
      %p157 = por %p155, %p156
      %s159 = sadd.s32 %s158, 1
      %p162 = scmp.eq.s32.totalorder %s22, 1
      %p163 = scmp.ne.s32.totalorder %s158, %s160
      %p164 = scmp.eq.s32.totalorder %s22, 0
      %p165 = por %p163, %p164
      %p166 = scmp.ne.s32.totalorder %s158, %s160
      %p167 = scmp.eq.s32.totalorder %s27, 1
      %p168 = por %p166, %p167
      %p169 = scmp.ne.s32.totalorder %s160, %s161
      %p170 = scmp.eq.s32.totalorder %s27, 0
      %p171 = por %p169, %p170
      %p172 = scmp.ne.s32.totalorder %s160, %s161
      %p173 = scmp.eq.s32.totalorder %s28, 1
      %p174 = por %p172, %p173
      %p176 = scmp.ne.s32.totalorder %s161, %s175
      %p177 = scmp.eq.s32.totalorder %s28, 0
      %p178 = por %p176, %p177
      %s179 = ssub.s32 %s22, %s29
      %p180 = scmp.eq.s32.totalorder %s179, 0
      %s182 = sadd.s32 %s181, 1
      %s183 = scalar_select %p180, %s181, %s182
      %p186 = pneg %p180
      %p187 = scmp.eq.s32.totalorder %s22, 1
      %p188 = por %p186, %p187
      %p189 = scmp.ne.s32.totalorder %s181, %s184
      %p190 = scmp.eq.s32.totalorder %s22, 0
      %p191 = por %p189, %p190
      %p192 = scmp.ne.s32.totalorder %s181, %s184
      %p193 = scmp.eq.s32.totalorder %s27, 1
      %p194 = por %p192, %p193
      %p195 = scmp.ne.s32.totalorder %s184, %s185
      %p196 = scmp.eq.s32.totalorder %s27, 0
      %p197 = por %p195, %p196
      %p198 = scmp.ne.s32.totalorder %s184, %s185
      %p199 = scmp.eq.s32.totalorder %s28, 1
      %p200 = por %p198, %p199
      %p202 = scmp.ne.s32.totalorder %s185, %s201
      %p203 = scmp.eq.s32.totalorder %s28, 0
      %p204 = por %p202, %p203
      %p205 = scmp.le.s32.totalorder 1, %s22
      %p206 = scmp.lt.s32.totalorder %s22, 3
      %p207 = pnand %p205, %p206
      %p208 = pneg %p207
      // Predicated region
      $region9: #{tpu_custom_call.1} parent=5 // pred_check
        _
      $region10: #{tpu_custom_call.1} parent=5 // pred_check_branch
        %210 = sbr.rel (%p207) target = $region12
      $region11: #{tpu_custom_call.1} parent=5 // pred_region
        %s211 = ssub.s32 %s22, 1
        // Predicated region
        $region13: #{tpu_custom_call.1} parent=11 // pred_check
          %p212 = pneg %p129
        $region14: #{tpu_custom_call.1} parent=11 // pred_check_branch
          %214 = sbr.rel (%p212) target = $region16
        $region15: #{tpu_custom_call.1} parent=11 // pred_region
          %s216 = ssub.s32 6144, 6144
          %217 = vsyncadd [#allocation9], %s216
          %s218 = sshll.u32 [#allocation8], 4
          %s219 = int_to_ptr.vmem [resolvable:$true] %s218
          %224 = dma.hbm_to_vmem [thread:$0]  %s3, 6144, %s219, [#allocation9], 128, 128, 8
        $region16: #{tpu_custom_call.1} parent=11 // pred_fallthru
          _
        // Predicated region
        $region17: #{tpu_custom_call.1} parent=11 // pred_check
          %p225 = pneg %p150
        $region18: #{tpu_custom_call.1} parent=11 // pred_check_branch
          %227 = sbr.rel (%p225) target = $region20
        $region19: #{tpu_custom_call.1} parent=11 // pred_region
          _
        $region20: #{tpu_custom_call.1} parent=11 // pred_fallthru
          _
        // Predicated region
        $region21: #{tpu_custom_call.1} parent=11 // pred_check
          %p228 = pneg %p171
        $region22: #{tpu_custom_call.1} parent=11 // pred_check_branch
          %230 = sbr.rel (%p228) target = $region24
        $region23: #{tpu_custom_call.1} parent=11 // pred_region
          _
        $region24: #{tpu_custom_call.1} parent=11 // pred_fallthru
          _
      $region12: #{tpu_custom_call.1} parent=5 // pred_fallthru
        _
      %p231 = scmp.lt.s32.totalorder %s22, 2
      // Predicated region
      $region25: #{tpu_custom_call.1} parent=5 // pred_check
        %p232 = pneg %p231
      $region26: #{tpu_custom_call.1} parent=5 // pred_check_branch
        %234 = sbr.rel (%p232) target = $region28
      $region27: #{tpu_custom_call.1} parent=5 // pred_region
        // Predicated region
        $region29: #{tpu_custom_call.1} parent=27 // pred_check
          %p235 = pneg %p42
        $region30: #{tpu_custom_call.1} parent=27 // pred_check_branch
          %237 = sbr.rel (%p235) target = $region32
        $region31: #{tpu_custom_call.1} parent=27 // pred_region
          %s238 = sand.u32 %s32, 1
          %s239 = scalar_lea.sflag [#allocation3], %s238
          %s240 = sand.u32 %s32, 1
          %s241 = smul.addr %s240, 8
          %s242 = scalar_lea.vmem [#allocation2], %s241
          %s244 = ssub.s32 128, 128
          %245 = vsyncadd %s239, %s244
          %s246 = smul.addr %s22, 128
          %s247 = scalar_lea.hbm %s0, %s246
          %s249 = sshll.u32 %s242, 4
          %s250 = int_to_ptr.vmem [resolvable:$true] %s249
          %252 = dma.hbm_to_vmem [thread:$0]  %s247, 128, %s250, %s239
        $region32: #{tpu_custom_call.1} parent=27 // pred_fallthru
          _
        // Predicated region
        $region33: #{tpu_custom_call.1} parent=27 // pred_check
          %p253 = pneg %p72
        $region34: #{tpu_custom_call.1} parent=27 // pred_check_branch
          %255 = sbr.rel (%p253) target = $region36
        $region35: #{tpu_custom_call.1} parent=27 // pred_region
          %s256 = sand.u32 %s22, 1
          %s257 = scalar_lea.sflag [#allocation6], %s256
          %s258 = sand.u32 %s62, 1
          %s259 = smul.addr %s258, 8
          %s260 = scalar_lea.vmem [#allocation5], %s259
          %p261 = scmp.lt.s32.totalorder %s22, 0
          %s262 = scalar_select %p261, %s22, 0
          %s264 = ssub.s32 128, 128
          %265 = vsyncadd %s257, %s264
          %s266 = smul.addr %s262, 128
          %s267 = scalar_lea.hbm %s1, %s266
          %s269 = sshll.u32 %s260, 4
          %s270 = int_to_ptr.vmem [resolvable:$true] %s269
          %272 = dma.hbm_to_vmem [thread:$0]  %s267, 128, %s270, %s257
        $region36: #{tpu_custom_call.1} parent=27 // pred_fallthru
          _
        // Predicated region
        $region37: #{tpu_custom_call.1} parent=27 // pred_check
          %p273 = pneg %p102
        $region38: #{tpu_custom_call.1} parent=27 // pred_check_branch
          %275 = sbr.rel (%p273) target = $region40
        $region39: #{tpu_custom_call.1} parent=27 // pred_region
          %s276 = sand.u32 %s22, 1
          %s277 = scalar_lea.sflag [#allocation6], %s276
          %s278 = sand.u32 %s92, 1
          %s279 = smul.addr %s278, 8
          %s280 = scalar_lea.vmem [#allocation7], %s279
          %p281 = scmp.lt.s32.totalorder %s22, 0
          %s282 = scalar_select %p281, %s22, 0
          %s284 = ssub.s32 128, 128
          %285 = vsyncadd %s277, %s284
          %s286 = smul.addr %s282, 128
          %s287 = scalar_lea.hbm %s2, %s286
          %s289 = sshll.u32 %s280, 4
          %s290 = int_to_ptr.vmem [resolvable:$true] %s289
          %292 = dma.hbm_to_vmem [thread:$0]  %s287, 128, %s290, %s277
        $region40: #{tpu_custom_call.1} parent=27 // pred_fallthru
          _
      $region28: #{tpu_custom_call.1} parent=5 // pred_fallthru
        _
      %p293 = scmp.le.s32.totalorder 1, %s22
      %p294 = scmp.lt.s32.totalorder %s22, 3
      %p295 = pnand %p293, %p294
      %p296 = pneg %p295
      // Predicated region
      $region41: #{tpu_custom_call.1} parent=5 // pred_check
        _
      $region42: #{tpu_custom_call.1} parent=5 // pred_check_branch
        %298 = sbr.rel (%p295) target = $region44
      $region43: #{tpu_custom_call.1} parent=5 // pred_region
        %s299 = ssub.s32 %s22, 1
        %s300 = sand.u32 %s35, 1
        %s301 = scalar_lea.sflag [#allocation3], %s300
        %s302 = sand.u32 %s35, 1
        %s303 = smul.addr %s302, 8
        %s304 = scalar_lea.vmem [#allocation2], %s303
        // Predicated region
        $region45: #{tpu_custom_call.1} parent=43 // pred_check
          %p305 = pneg %p48
        $region46: #{tpu_custom_call.1} parent=43 // pred_check_branch
          %307 = sbr.rel (%p305) target = $region48
        $region47: #{tpu_custom_call.1} parent=43 // pred_region
          %308 = dma.done %s301, 128
        $region48: #{tpu_custom_call.1} parent=43 // pred_fallthru
          _
        %s309 = sand.u32 %s27, 1
        %s310 = scalar_lea.sflag [#allocation6], %s309
        %s311 = sand.u32 %s65, 1
        %s312 = smul.addr %s311, 8
        %s313 = scalar_lea.vmem [#allocation5], %s312
        // Predicated region
        $region49: #{tpu_custom_call.1} parent=43 // pred_check
          %p314 = pneg %p78
        $region50: #{tpu_custom_call.1} parent=43 // pred_check_branch
          %316 = sbr.rel (%p314) target = $region52
        $region51: #{tpu_custom_call.1} parent=43 // pred_region
          %317 = dma.done %s310, 128
        $region52: #{tpu_custom_call.1} parent=43 // pred_fallthru
          _
        %s318 = sand.u32 %s27, 1
        %s319 = scalar_lea.sflag [#allocation6], %s318
        %s320 = sand.u32 %s95, 1
        %s321 = smul.addr %s320, 8
        %s322 = scalar_lea.vmem [#allocation7], %s321
        // Predicated region
        $region53: #{tpu_custom_call.1} parent=43 // pred_check
          %p323 = pneg %p108
        $region54: #{tpu_custom_call.1} parent=43 // pred_check_branch
          %325 = sbr.rel (%p323) target = $region56
        $region55: #{tpu_custom_call.1} parent=43 // pred_region
          %326 = dma.done %s319, 128
        $region56: #{tpu_custom_call.1} parent=43 // pred_fallthru
          _
        // Predicated region
        $region57: #{tpu_custom_call.1} parent=43 // pred_check
          %p327 = pneg %p129
        $region58: #{tpu_custom_call.1} parent=43 // pred_check_branch
          %329 = sbr.rel (%p327) target = $region60
        $region59: #{tpu_custom_call.1} parent=43 // pred_region
          %330 = dma.done [#allocation9], 6144
        $region60: #{tpu_custom_call.1} parent=43 // pred_fallthru
          _
        %s331 = sand.u32 %s35, 1
        %s332 = scalar_lea.sflag [#allocation3], %s331
        %s333 = sand.u32 %s35, 1
        %s334 = smul.addr %s333, 8
        %s335 = scalar_lea.vmem [#allocation2], %s334
        %p336 = pneg %p48
        %p337 = pneg %p45
        %s338 = sand.u32 %s27, 1
        %s339 = scalar_lea.sflag [#allocation6], %s338
        %s340 = sand.u32 %s65, 1
        %s341 = smul.addr %s340, 8
        %s342 = scalar_lea.vmem [#allocation5], %s341
        %p343 = pneg %p78
        %p344 = pneg %p75
        %s345 = sand.u32 %s27, 1
        %s346 = scalar_lea.sflag [#allocation6], %s345
        %s347 = sand.u32 %s95, 1
        %s348 = smul.addr %s347, 8
        %s349 = scalar_lea.vmem [#allocation7], %s348
        %p350 = pneg %p108
        %p351 = pneg %p105
        %p352 = pneg %p129
        %p353 = pneg %p126
        %p354 = pneg %p150
        %p355 = pneg %p147
        %p356 = pneg %p171
        %p357 = pneg %p168
        %p358 = pneg %p197
        %p359 = pneg %p194
        %s360 = sand.u32 %s184, 1
        %s361 = scalar_lea.sflag [#allocation4], %s360
        %s362 = sand.u32 %s184, 1
        %s363 = smul.addr %s362, 8
        %s364 = scalar_lea.vmem [#allocation10], %s363
        %p365 = scmp.lt.s32.totalorder %s27, 0
        %s366 = scalar_select %p365, %s27, 0
        %p367 = scmp.lt.s32.totalorder %s27, 0
        %s368 = scalar_select %p367, %s27, 0
        %v369 = vld [vmem:[%s304] sm:$0xff]
        %v370 = vld [vmem:[%s4] sm:$0x1]
        %v371 = vld [vmem:[%s5] sm:$0x1]
        %p372 = scmp.lt.s32.totalorder %s27, 1
        // Predicated region
        $region61: #{tpu_custom_call.1} parent=43 // pred_check
          %p373 = pneg %p372
        $region62: #{tpu_custom_call.1} parent=43 // pred_check_branch
          %375 = sbr.rel (%p373) target = $region64
        $region63: #{tpu_custom_call.1} parent=43 // pred_region
          %v376 = vld [vmem:[%s313] sm:$0xff]
          %v377 = vld [vmem:[%s322] sm:$0xff]
          %v378 = vld [vmem:[#allocation8] sm:$0xff]
          %v379 = vld [vmem:[#allocation8 + $0x8] sm:$0xff]
          %v380 = vld [vmem:[#allocation8 + $0x10] sm:$0xff]
          %v381 = vld [vmem:[#allocation8 + $0x18] sm:$0xff]
          %v382 = vld [vmem:[#allocation8 + $0x20] sm:$0xff]
          %v383 = vld [vmem:[#allocation8 + $0x28] sm:$0xff]
          %v384 = vld [vmem:[#allocation8 + $0x30] sm:$0xff]
          %v385 = vld [vmem:[#allocation8 + $0x38] sm:$0xff]
          %v386 = vld [vmem:[#allocation8 + $0x40] sm:$0xff]
          %v387 = vld [vmem:[#allocation8 + $0x48] sm:$0xff]
          %v388 = vld [vmem:[#allocation8 + $0x50] sm:$0xff]
          %v389 = vld [vmem:[#allocation8 + $0x58] sm:$0xff]
          %v390 = vld [vmem:[#allocation8 + $0x60] sm:$0xff]
          %v391 = vld [vmem:[#allocation8 + $0x68] sm:$0xff]
          %v392 = vld [vmem:[#allocation8 + $0x70] sm:$0xff]
          %v393 = vld [vmem:[#allocation8 + $0x78] sm:$0xff]
          %v394 = vld [vmem:[#allocation8 + $0x80] sm:$0xff]
          %v395 = vld [vmem:[#allocation8 + $0x88] sm:$0xff]
          %v396 = vld [vmem:[#allocation8 + $0x90] sm:$0xff]
          %v397 = vld [vmem:[#allocation8 + $0x98] sm:$0xff]
          %v398 = vld [vmem:[#allocation8 + $0xa0] sm:$0xff]
          %v399 = vld [vmem:[#allocation8 + $0xa8] sm:$0xff]
          %v400 = vld [vmem:[#allocation8 + $0xb0] sm:$0xff]
          %v401 = vld [vmem:[#allocation8 + $0xb8] sm:$0xff]
          %v402 = vld [vmem:[#allocation8 + $0xc0] sm:$0xff]
          %v403 = vld [vmem:[#allocation8 + $0xc8] sm:$0xff]
          %v404 = vld [vmem:[#allocation8 + $0xd0] sm:$0xff]
          %v405 = vld [vmem:[#allocation8 + $0xd8] sm:$0xff]
          %v406 = vld [vmem:[#allocation8 + $0xe0] sm:$0xff]
          %v407 = vld [vmem:[#allocation8 + $0xe8] sm:$0xff]
          %v408 = vld [vmem:[#allocation8 + $0xf0] sm:$0xff]
          %v409 = vld [vmem:[#allocation8 + $0xf8] sm:$0xff]
          %v410 = vld [vmem:[#allocation8 + $0x100] sm:$0xff]
          %v411 = vld [vmem:[#allocation8 + $0x108] sm:$0xff]
          %v412 = vld [vmem:[#allocation8 + $0x110] sm:$0xff]
          %v413 = vld [vmem:[#allocation8 + $0x118] sm:$0xff]
          %v414 = vld [vmem:[#allocation8 + $0x120] sm:$0xff]
          %v415 = vld [vmem:[#allocation8 + $0x128] sm:$0xff]
          %v416 = vld [vmem:[#allocation8 + $0x130] sm:$0xff]
          %v417 = vld [vmem:[#allocation8 + $0x138] sm:$0xff]
          %v418 = vld [vmem:[#allocation8 + $0x140] sm:$0xff]
          %v419 = vld [vmem:[#allocation8 + $0x148] sm:$0xff]
          %v420 = vld [vmem:[#allocation8 + $0x150] sm:$0xff]
          %v421 = vld [vmem:[#allocation8 + $0x158] sm:$0xff]
          %v422 = vld [vmem:[#allocation8 + $0x160] sm:$0xff]
          %v423 = vld [vmem:[#allocation8 + $0x168] sm:$0xff]
          %v424 = vld [vmem:[#allocation8 + $0x170] sm:$0xff]
          %v425 = vld [vmem:[#allocation8 + $0x178] sm:$0xff]
          %426 = vmatprep.subr.mxu0 0.0
          %427 = vmatpush1.msra.mxu0 %v378
          %428 = vmatprep.subr.mxu0 0.0
          %429 = vmatpush1.msra.mxu0 %v379
          %430 = vmatprep.subr.mxu0 0.0
          %431 = vmatpush1.msra.mxu0 %v380
          %432 = vmatprep.subr.mxu0 0.0
          %433 = vmatpush1.msra.mxu0 %v381
          %434 = vmatprep.subr.mxu0 0.0
          %435 = vmatpush1.msra.mxu0 %v382
          %436 = vmatprep.subr.mxu0 0.0
          %437 = vmatpush1.msra.mxu0 %v383
          %438 = vmatprep.subr.mxu0 0.0
          %439 = vmatpush1.msra.mxu0 %v384
          %440 = vmatprep.subr.mxu0 0.0
          %441 = vmatpush1.msra.mxu0 %v385
          %442 = vmatprep.subr.mxu0 0.0
          %443 = vmatpush1.msra.mxu0 %v386
          %444 = vmatprep.subr.mxu0 0.0
          %445 = vmatpush1.msra.mxu0 %v387
          %446 = vmatprep.subr.mxu0 0.0
          %447 = vmatpush1.msra.mxu0 %v388
          %448 = vmatprep.subr.mxu0 0.0
          %449 = vmatpush1.msra.mxu0 %v389
          %450 = vmatprep.subr.mxu0 0.0
          %451 = vmatpush1.msra.mxu0 %v390
          %452 = vmatprep.subr.mxu0 0.0
          %453 = vmatpush1.msra.mxu0 %v391
          %454 = vmatprep.subr.mxu0 0.0
          %455 = vmatpush1.msra.mxu0 %v392
          %456 = vmatprep.subr.mxu0 0.0
          %457 = vmatpush1.msra.mxu0 %v393
          %458 = vmatprep.subr.mxu0 0.0
          %459 = vmatpush1.msra.mxu0 %v394
          %460 = vmatprep.subr.mxu0 0.0
          %461 = vmatpush1.msra.mxu0 %v395
          %462 = vmatprep.subr.mxu0 0.0
          %463 = vmatpush1.msra.mxu0 %v396
          %464 = vmatprep.subr.mxu0 0.0
          %465 = vmatpush1.msra.mxu0 %v397
          %466 = vmatprep.subr.mxu0 0.0
          %467 = vmatpush1.msra.mxu0 %v398
          %468 = vmatprep.subr.mxu0 0.0
          %469 = vmatpush1.msra.mxu0 %v399
          %470 = vmatprep.subr.mxu0 0.0
          %471 = vmatpush1.msra.mxu0 %v400
          %472 = vmatprep.subr.mxu0 0.0
          %473 = vmatpush1.msra.mxu0 %v401
          %474 = vmatprep.subr.mxu0 0.0
          %475 = vmatpush1.msra.mxu0 %v402
          %476 = vmatprep.subr.mxu0 0.0
          %477 = vmatpush1.msra.mxu0 %v403
          %478 = vmatprep.subr.mxu0 0.0
          %479 = vmatpush1.msra.mxu0 %v404
          %480 = vmatprep.subr.mxu0 0.0
          %481 = vmatpush1.msra.mxu0 %v405
          %482 = vmatprep.subr.mxu0 0.0
          %483 = vmatpush1.msra.mxu0 %v406
          %484 = vmatprep.subr.mxu0 0.0
          %485 = vmatpush1.msra.mxu0 %v407
          %486 = vmatprep.subr.mxu0 0.0
          %487 = vmatpush1.msra.mxu0 %v408
          %488 = vmatprep.subr.mxu0 0.0
          %489 = vmatpush1.msra.mxu0 %v409
          %490 = vmatprep.mubr.f32.mxu0 %v376
          %491 = vmatmul.mubr.f32.gmra.mrb[0].mxu0 %v369
          %v492 = vpop.f32.mrb[0].mxu0
          %v493 = vadd.f32 0.0, %v492
          %v494 = vpop.f32.mrb[0].mxu0
          %495 = vdwg.mxu0
          %496 = vmatprep.subr.mxu0 0.0
          %497 = vmatpush1.msra.mxu0 %v410
          %498 = vmatprep.subr.mxu0 0.0
          %499 = vmatpush1.msra.mxu0 %v411
          %500 = vmatprep.subr.mxu0 0.0
          %501 = vmatpush1.msra.mxu0 %v412
          %502 = vmatprep.subr.mxu0 0.0
          %503 = vmatpush1.msra.mxu0 %v413
          %504 = vmatprep.subr.mxu0 0.0
          %505 = vmatpush1.msra.mxu0 %v414
          %506 = vmatprep.subr.mxu0 0.0
          %507 = vmatpush1.msra.mxu0 %v415
          %508 = vmatprep.subr.mxu0 0.0
          %509 = vmatpush1.msra.mxu0 %v416
          %510 = vmatprep.subr.mxu0 0.0
          %511 = vmatpush1.msra.mxu0 %v417
          %512 = vmatprep.subr.mxu0 0.0
          %513 = vmatpush1.msra.mxu0 %v418
          %514 = vmatprep.subr.mxu0 0.0
          %515 = vmatpush1.msra.mxu0 %v419
          %516 = vmatprep.subr.mxu0 0.0
          %517 = vmatpush1.msra.mxu0 %v420
          %518 = vmatprep.subr.mxu0 0.0
          %519 = vmatpush1.msra.mxu0 %v421
          %520 = vmatprep.subr.mxu0 0.0
          %521 = vmatpush1.msra.mxu0 %v422
          %522 = vmatprep.subr.mxu0 0.0
          %523 = vmatpush1.msra.mxu0 %v423
          %524 = vmatprep.subr.mxu0 0.0
          %525 = vmatpush1.msra.mxu0 %v424
          %526 = vmatprep.subr.mxu0 0.0
          %527 = vmatpush1.msra.mxu0 %v425
          %528 = vmatprep.subr.mxu0 0.0
          %529 = vmatpush1.msra.mxu0 0.0
          %530 = vmatprep.subr.mxu0 0.0
          %531 = vmatpush1.msra.mxu0 0.0
          %532 = vmatprep.subr.mxu0 0.0
          %533 = vmatpush1.msra.mxu0 0.0
          %534 = vmatprep.subr.mxu0 0.0
          %535 = vmatpush1.msra.mxu0 0.0
          %536 = vmatprep.subr.mxu0 0.0
          %537 = vmatpush1.msra.mxu0 0.0
          %538 = vmatprep.subr.mxu0 0.0
          %539 = vmatpush1.msra.mxu0 0.0
          %540 = vmatprep.subr.mxu0 0.0
          %541 = vmatpush1.msra.mxu0 0.0
          %542 = vmatprep.subr.mxu0 0.0
          %543 = vmatpush1.msra.mxu0 0.0
          %544 = vmatprep.subr.mxu0 0.0
          %545 = vmatpush1.msra.mxu0 0.0
          %546 = vmatprep.subr.mxu0 0.0
          %547 = vmatpush1.msra.mxu0 0.0
          %548 = vmatprep.subr.mxu0 0.0
          %549 = vmatpush1.msra.mxu0 0.0
          %550 = vmatprep.subr.mxu0 0.0
          %551 = vmatpush1.msra.mxu0 0.0
          %552 = vmatprep.subr.mxu0 0.0
          %553 = vmatpush1.msra.mxu0 0.0
          %554 = vmatprep.subr.mxu0 0.0
          %555 = vmatpush1.msra.mxu0 0.0
          %556 = vmatprep.subr.mxu0 0.0
          %557 = vmatpush1.msra.mxu0 0.0
          %558 = vmatprep.subr.mxu0 0.0
          %559 = vmatpush1.msra.mxu0 0.0
          %560 = vmatprep.mubr.f32.mxu0 0.0
          %561 = vmatmul.mubr.f32.gmra.mrb[0].mxu0 %v377
          %v562 = vpop.f32.mrb[0].mxu0
          %v563 = vadd.f32 %v493, %v562
          %v564 = vpop.f32.mrb[0].mxu0
          %565 = vdwg.mxu0
          %v566 = vxor.u32 %v563, 2147483648
          %v567 = vmul.f32 %v566, 1.442695
          %v568 = vpow.pop %v567
          %v569 = vadd.f32 %v568, 1.0
          %v570 = vrcp.pop %v569
          %v571 = vmul.f32 1.0, %v570
          %v572 = vmul.f32 %v369, %v571
          %v573 = vadd.f32 %v572, %v376
          %s574 = smul.u32 %s27, 8
          %v575 = vlaneseq
          %v576 = vshrl.u32 %v575, 7
          %v577 = vstv %s574
          %v578 = vadd.s32 %v577, %v576
          %vm579 = vcmp.lt.s32.totalorder %v578, 5
          %v580 = vsel %vm579, %v573, %v369
          %v581 = vlaneseq
          %v582 = vand.u32 %v581, 127
          %vm583 = vcmp.lt.s32.totalorder %v582, 32
          %584 = vadd.xlane.f32.xlu0 %v580
          %v585 = vpop.xlane.xlu0 %584
          %v586 = vmul.f32 %v585, 0.03125
          %v587 = vsub.f32 %v580, %v586
          %v588 = vsel %vm583, 1, 0
          %vm589 = vcmp.eq.s32.totalorder %v588, 1
          %v590 = vsel %vm589, %v587, 0.0
          %v591 = vmul.f32 %v590, %v590
          %592 = vadd.xlane.f32.xlu0 %v591
          %v593 = vpop.xlane.xlu0 %592
          %v594 = vmul.f32 %v593, 0.03125
          %v595 = vadd.f32 %v594, 1e-05
          %v596 = vrsqrt.pop %v595
          %v597 = vmul.f32 %v590, %v596
          %v599 = vlaneseq
          %v600 = vshrl.u32 %v599, 7
          %v601 = vsub.s32 0, %v600
          %v602 = vrot.slane %v370, %v601
          %v604 = vmul.f32 %v597, %v602
          %v606 = vlaneseq
          %v607 = vshrl.u32 %v606, 7
          %v608 = vsub.s32 0, %v607
          %v609 = vrot.slane %v371, %v608
          %v611 = vadd.f32 %v604, %v609
          %612 = vst [vmem:[%s364] sm:$0xff] %v611
        $region64: #{tpu_custom_call.1} parent=43 // pred_fallthru
          _
        %p613 = scmp.ge.s32.totalorder %s27, 1
        // Predicated region
        $region65: #{tpu_custom_call.1} parent=43 // pred_check
          %p614 = pneg %p613
        $region66: #{tpu_custom_call.1} parent=43 // pred_check_branch
          %616 = sbr.rel (%p614) target = $region68
        $region67: #{tpu_custom_call.1} parent=43 // pred_region
          %v617 = vlaneseq
          %v618 = vand.u32 %v617, 127
          %vm619 = vcmp.lt.s32.totalorder %v618, 32
          %620 = vadd.xlane.f32.xlu0 %v369
          %v621 = vpop.xlane.xlu0 %620
          %v622 = vmul.f32 %v621, 0.03125
          %v623 = vsub.f32 %v369, %v622
          %v624 = vsel %vm619, 1, 0
          %vm625 = vcmp.eq.s32.totalorder %v624, 1
          %v626 = vsel %vm625, %v623, 0.0
          %v627 = vmul.f32 %v626, %v626
          %628 = vadd.xlane.f32.xlu0 %v627
          %v629 = vpop.xlane.xlu0 %628
          %v630 = vmul.f32 %v629, 0.03125
          %v631 = vadd.f32 %v630, 1e-05
          %v632 = vrsqrt.pop %v631
          %v633 = vmul.f32 %v626, %v632
          %v635 = vlaneseq
          %v636 = vshrl.u32 %v635, 7
          %v637 = vsub.s32 0, %v636
          %v638 = vrot.slane %v370, %v637
          %v640 = vmul.f32 %v633, %v638
          %v642 = vlaneseq
          %v643 = vshrl.u32 %v642, 7
          %v644 = vsub.s32 0, %v643
          %v645 = vrot.slane %v371, %v644
          %v647 = vadd.f32 %v640, %v645
          %648 = vst [vmem:[%s364] sm:$0xff] %v647
        $region68: #{tpu_custom_call.1} parent=43 // pred_fallthru
          _
        %s649 = sand.u32 %s184, 1
        %s650 = scalar_lea.sflag [#allocation4], %s649
        %s651 = sand.u32 %s184, 1
        %s652 = smul.addr %s651, 8
        %s653 = scalar_lea.vmem [#allocation10], %s652
        // Predicated region
        $region69: #{tpu_custom_call.1} parent=43 // pred_check
          %p654 = pneg %p194
        $region70: #{tpu_custom_call.1} parent=43 // pred_check_branch
          %656 = sbr.rel (%p654) target = $region72
        $region71: #{tpu_custom_call.1} parent=43 // pred_region
          %s658 = ssub.s32 128, 128
          %659 = vsyncadd %s650, %s658
          %s660 = smul.addr %s27, 128
          %s661 = scalar_lea.hbm %s6, %s660
          %s663 = sshll.u32 %s653, 4
          %s664 = int_to_ptr.vmem [resolvable:$true] %s663
          %666 = dma.vmem_to_hbm [thread:$0]  %s664, 128, %s661, %s650
        $region72: #{tpu_custom_call.1} parent=43 // pred_fallthru
          _
      $region44: #{tpu_custom_call.1} parent=5 // pred_fallthru
        _
      %p667 = scmp.le.s32.totalorder 2, %s22
      // Predicated region
      $region73: #{tpu_custom_call.1} parent=5 // pred_check
        %p668 = pneg %p667
      $region74: #{tpu_custom_call.1} parent=5 // pred_check_branch
        %670 = sbr.rel (%p668) target = $region76
      $region75: #{tpu_custom_call.1} parent=5 // pred_region
        %s671 = ssub.s32 %s22, 2
        // Predicated region
        $region77: #{tpu_custom_call.1} parent=75 // pred_check
          %p672 = pneg %p200
        $region78: #{tpu_custom_call.1} parent=75 // pred_check_branch
          %674 = sbr.rel (%p672) target = $region80
        $region79: #{tpu_custom_call.1} parent=75 // pred_region
          %s675 = sand.u32 %s185, 1
          %s676 = scalar_lea.sflag [#allocation4], %s675
          %s677 = sand.u32 %s185, 1
          %s678 = smul.addr %s677, 8
          %s679 = scalar_lea.vmem [#allocation10], %s678
          %680 = dma.done %s676, 128
        $region80: #{tpu_custom_call.1} parent=75 // pred_fallthru
          _
      $region76: #{tpu_custom_call.1} parent=5 // pred_fallthru
        _
    $region6: #{tpu_custom_call.1} parent=1 // loop_footer
      %s26 = sadd.s32 1, %s22
    $region7: #{tpu_custom_call.1} parent=1 // loop_footer_branch
      %21 = sbr.rel target = $region3
    $region8: #{tpu_custom_call.1} parent=1 // loop_exit
      _
    %681 = vsyncpa [#allocation3], 1
    %s682 = scalar_lea.sflag [#allocation3], 1
    %683 = vsyncpa %s682, 1
    %684 = vsyncpa [#allocation6], 1
    %s685 = scalar_lea.sflag [#allocation6], 1
    %686 = vsyncpa %s685, 1
    %687 = vsyncpa [#allocation9], 1
    %688 = vsyncpa [#allocation4], 1
    %s689 = scalar_lea.sflag [#allocation4], 1
    %690 = vsyncpa %s689, 1

</llo_original>
